<compile_context>
chip_gen: v6e
topology: v6e:2x2x1
jax: 0.10.0
libtpu: 0.0.40
codegen_flags: <defaults>
</compile_context>

<pallas_src>
import jax
import jax.numpy as jnp
from jax.experimental import pallas as pl
from jax.experimental.pallas import tpu as pltpu


def _binarize_kernel(x_ref, o_ref):
    # Single compare + cast: 1 where x > 0, else 0, in the output dtype.
    # (Matches torch.where(inp > 0, 1, 0): NaN -> 0, -0.0 -> 0.)
    o_ref[...] = (x_ref[...] > 0).astype(o_ref.dtype)


def _round_up(x, m):
    return ((x + m - 1) // m) * m


def _chip_generation():
    """Best-effort TPU generation detection (5, 6, 7); 0 if unknown."""
    try:
        kind = jax.devices()[0].device_kind.lower()
    except Exception:
        return 0
    for gen in (7, 6, 5):
        if f"v{gen}" in kind:
            return gen
    return 0


def _binarize_2d(x2d, dtype, *, donate=False):
    """Run the binarize kernel over a lane-dense (rows, L) view."""
    rows, L = x2d.shape
    itemsize = jnp.dtype(dtype).itemsize
    sublane = {4: 8, 2: 16, 1: 32}.get(itemsize, 8)

    gen = _chip_generation()
    # Per-buffer DMA tile budget, gated on generation (scoped-VMEM defaults:
    # v5e 16 MiB, v6e 32 MiB, v7x 32 of 64 MiB; double-buffered in + out).
    target_bytes = {5: 3 << 20, 6: 5 << 20, 7: 4 << 20}.get(gen, 3 << 20)
    vmem_limit = {5: None, 6: 24 << 20, 7: 24 << 20}.get(gen, None)

    row_bytes = L * itemsize
    array_bytes = rows * row_bytes

    if rows <= sublane:
        # Tiny array: one full-extent block (always a legal block shape).
        tile_rows = rows
    else:
        tile_rows = max(sublane, (target_bytes // row_bytes) // sublane * sublane)
        if array_bytes > 2 * target_bytes:
            # Larger than ~2 tiles: guarantee at least 4 grid steps so the
            # read/write DMA streams overlap and v7x can use both TCs.
            cap = max(sublane, _round_up(pl.cdiv(rows, 4), sublane))
            tile_rows = min(tile_rows, cap)
        elif array_bytes > (512 << 10) and rows >= 2 * sublane:
            # Mid-size: at least 2 steps for in/out overlap.
            cap = max(sublane, _round_up(pl.cdiv(rows, 2), sublane))
            tile_rows = min(tile_rows, cap)
        tile_rows = min(tile_rows, _round_up(rows, sublane))

    steps = pl.cdiv(rows, tile_rows)

    # v7x: prefer an even number of steps so both TensorCores get equal work.
    if gen == 7 and steps > 1 and steps % 2 == 1 and rows > sublane:
        alt = max(sublane, _round_up(pl.cdiv(rows, steps + 1), sublane))
        if pl.cdiv(rows, alt) % 2 == 0:
            tile_rows = alt
            steps = pl.cdiv(rows, tile_rows)

    cp_kwargs = dict(dimension_semantics=("parallel",))
    if vmem_limit is not None:
        cp_kwargs["vmem_limit_bytes"] = vmem_limit

    extra_kwargs = {}
    if donate:
        # Only beneficial if the caller actually donates the input buffer.
        extra_kwargs["input_output_aliases"] = {0: 0}

    return pl.pallas_call(
        _binarize_kernel,
        out_shape=jax.ShapeDtypeStruct((rows, L), dtype),
        grid=(steps,),
        in_specs=[pl.BlockSpec((tile_rows, L), lambda i: (i, 0))],
        out_specs=pl.BlockSpec((tile_rows, L), lambda i: (i, 0)),
        compiler_params=pltpu.CompilerParams(**cp_kwargs),
        cost_estimate=pl.CostEstimate(
            flops=rows * L,
            transcendentals=0,
            bytes_accessed=2 * rows * L * itemsize,
        ),
        **extra_kwargs,
    )(x2d)


def _binarized_forward_impl(inp, donate_input=False):
    orig_shape = inp.shape
    dtype = inp.dtype
    total = int(inp.size)

    if total == 0:
        return inp

    flat = inp.reshape(-1)  # free for contiguous inputs

    # Pick a lane-dense width L (multiple of 128). Prefer an L that divides
    # `total` AND leaves >= 8 rows (full vreg sublane occupancy); otherwise
    # any dividing L; otherwise fall through to the ragged path.
    candidates = (2048, 1024, 512, 256, 128)
    L = None
    for cand in candidates:
        if total % cand == 0 and total // cand >= 8:
            L = cand
            break
    if L is None:
        for cand in candidates:
            if total % cand == 0:
                L = cand
                break

    if L is not None:
        out2d = _binarize_2d(flat.reshape(total // L, L), dtype, donate=donate_input)
        return out2d.reshape(orig_shape)

    # ---- Ragged case (total not a multiple of 128) ----
    # Kernel over the lane-aligned prefix; < L-element tail via jnp.where.
    # No full-array pad / slice copies.
    L = 512
    main_total = (total // L) * L
    if main_total == 0:
        out_flat = jnp.where(flat > 0, jnp.ones_like(flat), jnp.zeros_like(flat))
        return out_flat.reshape(orig_shape)
    main_out = _binarize_2d(
        flat[:main_total].reshape(main_total // L, L), dtype
    ).reshape(-1)
    tail = flat[main_total:]
    tail_out = jnp.where(tail > 0, jnp.ones_like(tail), jnp.zeros_like(tail))
    # TODO(synk): the concatenate re-materializes the output once in the rare
    # ragged case; a zero-copy variant would need manual DMA of the tail.
    return jnp.concatenate([main_out, tail_out]).reshape(orig_shape)


binarized_forward = jax.jit(_binarized_forward_impl, static_argnames=("donate_input",))


if __name__ == "__main__":
    # BinarizedModule has no parameters; just build a deterministic NCHW input.
    key = jax.random.PRNGKey(0)
    x = jax.random.normal(key, (2, 4, 16, 16), dtype=jnp.float32)

    out = binarized_forward(x)
    out = jax.block_until_ready(out)

    # Correctness check against the reference semantics.
    ref = jnp.where(x > 0, jnp.ones_like(x), jnp.zeros_like(x))
    assert out.shape == x.shape and out.dtype == x.dtype
    assert bool(jnp.all(out == ref))

    print("KERNEL_OK")
</pallas_src>

<mosaic_0001>
module attributes {stable_mosaic.version = 11 : i64} {
  func.func @_binarize_kernel(%arg0: i32, %arg1: memref<8x256xf32, #tpu.memory_space<vmem>>, %arg2: memref<8x256xf32, #tpu.memory_space<vmem>>) attributes {dimension_semantics = [#tpu.dimension_semantics<parallel>], iteration_bounds = array<i64: 1>, scalar_prefetch = 0 : i64, scratch_operands = 0 : i64, tpu.core_type = #tpu.core_type<tc>, window_params = [{transform_indices = @transform_0, window_bounds = array<i64: 8, 256>}, {transform_indices = @transform_1, window_bounds = array<i64: 8, 256>}]} {
    %c0 = arith.constant 0 : index
    %c0_0 = arith.constant 0 : index
    %0 = vector.load %arg1[%c0, %c0_0] : memref<8x256xf32, #tpu.memory_space<vmem>>, vector<8x256xf32>
    %cst = arith.constant 0.000000e+00 : f32
    %1 = vector.broadcast %cst : f32 to vector<8x256xf32>
    %2 = arith.cmpf ogt, %0, %1 : vector<8x256xf32>
    %3 = arith.extui %2 : vector<8x256xi1> to vector<8x256xi32>
    %4 = arith.sitofp %3 : vector<8x256xi32> to vector<8x256xf32>
    %c0_1 = arith.constant 0 : index
    %c0_2 = arith.constant 0 : index
    %5 = vector.load %arg2[%c0_1, %c0_2] : memref<8x256xf32, #tpu.memory_space<vmem>>, vector<8x256xf32>
    tpu.vector_store %arg2[%c0_1, %c0_2], %4 {strides = array<i32>} : memref<8x256xf32, #tpu.memory_space<vmem>>, vector<8x256xf32>,
    return
  }
  func.func @transform_0(%arg0: i32) -> (i32, i32) {
    %c0_i32 = arith.constant 0 : i32
    %c0_i32_0 = arith.constant 0 : i32
    return %arg0, %c0_i32 : i32, i32
  }
  func.func @transform_1(%arg0: i32) -> (i32, i32) {
    %c0_i32 = arith.constant 0 : i32
    %c0_i32_0 = arith.constant 0 : i32
    return %arg0, %c0_i32 : i32, i32
  }
}

</mosaic_0001>

<llo_original>
// kernel: _binarized_forward_impl.1
$region0: #{_binarized_forward_impl.1}
  #allocation0 [shape = 'u32[]', space=smem, size = 0x4, offset = 0x4, fixed_abs, tag = 'smem constant byte address 0x4 - core index']
  #allocation1 [shape = 'u32[144,128]{1,0:T(1,128)}', space=vmem, size = 0x12000, scoped, tag = 'internal scratch']
  %s0 = inlined_call_operand.vmem [shape: f32[8,256], index: 0, kind: input, shape index: {}]
  %s1 = inlined_call_operand.vmem [shape: f32[8,256], index: 1, kind: output, shape index: {}]
  %s2 = sld [smem:[#allocation0]]
  $region14: #{_binarized_forward_impl.1} parent=0
    _
  %s4 = ssub.s32 1, %s2
  %s5 = scalar_select 0, %s4, %s2
  // Predicated region
  $region2: #{_binarized_forward_impl.1} parent=0 // pred_check
    _
  $region3: #{_binarized_forward_impl.1} parent=0 // pred_check_branch
    %7 = sbr.rel (0) target = $region5
  $region4: #{_binarized_forward_impl.1} parent=0 // pred_region
    _
  $region5: #{_binarized_forward_impl.1} parent=0 // pred_fallthru
    _
  %v8 = vld [vmem:[%s0] sm:$0xff]
  %v9 = vld [vmem:[%s0 + $0x8] sm:$0xff]
  %vm10 = vcmp.gt.f32.partialorder %v8, 0.0
  %vm11 = vcmp.gt.f32.partialorder %v9, 0.0
  %v12 = vsel %vm10, 1, 0
  %v13 = vsel %vm11, 1, 0
  %v14 = vcvt.s32.f32 %v12
  %v15 = vcvt.s32.f32 %v13
  %16 = vst [vmem:[%s1] sm:$0xff] %v14
  %17 = vst [vmem:[%s1 + $0x8] sm:$0xff] %v15
  // Predicated region
  $region6: #{_binarized_forward_impl.1} parent=0 // pred_check
    _
  $region7: #{_binarized_forward_impl.1} parent=0 // pred_check_branch
    %19 = sbr.rel (0) target = $region9
  $region8: #{_binarized_forward_impl.1} parent=0 // pred_region
    _
  $region9: #{_binarized_forward_impl.1} parent=0 // pred_fallthru
    _
  // Predicated region
  $region10: #{_binarized_forward_impl.1} parent=0 // pred_check
    _
  $region11: #{_binarized_forward_impl.1} parent=0 // pred_check_branch
    %21 = sbr.rel (0) target = $region13
  $region12: #{_binarized_forward_impl.1} parent=0 // pred_region
    _
  $region13: #{_binarized_forward_impl.1} parent=0 // pred_fallthru
    _

</llo_original>
